<compile_context>
chip_gen: v5e
topology: v5e:2x2
jax: 0.10.0
libtpu: 0.0.40
codegen_flags: <defaults>
</compile_context>

<pallas_src>
import functools

import jax
import jax.numpy as jnp
from jax.experimental import pallas as pl
from jax.experimental.pallas import tpu as pltpu


def qwen_mlp_kernel(F, x_ref, w1_ref, w2_ref, cp_ref, o_ref, acc_ref):
    # x_ref:   (tm, H)   row tile of flattened hidden states
    # w1_ref:  (H, tf)   column tile of w1.weight.T
    # w2_ref:  (H, tf)   column tile of w2.weight.T
    # cp_ref:  (tf, H)   matching row tile of c_proj.weight.T
    # o_ref:   (tm, H)   output tile (same block across f -> accumulator pattern)
    # acc_ref: (tm, H)   f32 VMEM accumulator, persists across the f axis
    f = pl.program_id(1)

    @pl.when(f == 0)
    def _():
        acc_ref[...] = jnp.zeros_like(acc_ref)

    # Up-projections on the MXU with f32 accumulation.
    a1 = jnp.dot(x_ref[...], w1_ref[...], preferred_element_type=jnp.float32)
    a2 = jnp.dot(x_ref[...], w2_ref[...], preferred_element_type=jnp.float32)
    # SwiGLU gate in f32 (sigmoid goes to the EUP slot).
    inter = a1 * (a2 * jax.nn.sigmoid(a2))

    tf = w1_ref.shape[1]
    cp = cp_ref[...]
    if F % tf != 0:
        # Static ragged-F path: the last f-tile extends past F, so zero both the
        # gate columns and the matching c_proj rows; out-of-range (garbage-padded)
        # data then contributes exactly 0 to the accumulation.
        col = jax.lax.broadcasted_iota(jnp.int32, inter.shape, 1)
        inter = jnp.where(f * tf + col < F, inter, 0.0)
        row = jax.lax.broadcasted_iota(jnp.int32, (tf, 1), 0)
        cp = jnp.where(f * tf + row < F, cp, jnp.zeros((), cp.dtype))

    acc_ref[...] += jnp.dot(inter.astype(cp.dtype), cp,
                            preferred_element_type=jnp.float32)

    @pl.when(f == pl.num_programs(1) - 1)
    def _():
        o_ref[...] = acc_ref[...].astype(o_ref.dtype)


@functools.partial(jax.jit, static_argnames=("tm_max", "tf_max"))
def qwen_mlp(hidden_states, w1_t, w2_t, cproj_t, *, tm_max=512, tf_max=1024):
    """hidden_states: (B, S, H). Weights already transposed to (in, out). No biases."""
    B, S, H = hidden_states.shape
    Hw, F = w1_t.shape
    assert Hw == H and w2_t.shape == (H, F) and cproj_t.shape == (F, H)
    assert tm_max % 8 == 0 and tf_max % 128 == 0 and tf_max >= 128

    M = B * S
    x2d = hidden_states.reshape(M, H)
    xb = jnp.dtype(hidden_states.dtype).itemsize
    wb = jnp.dtype(w1_t.dtype).itemsize

    # ---- Initial tile sizes: either the full dim (always legal) or a (8,128)-legal tile.
    tm = M if M <= tm_max else tm_max          # full dim, or multiple of 8
    tf = F if F <= tf_max else tf_max          # full dim, or multiple of 128

    # ---- Generation-aware VMEM budget (v7x: 64 MiB/TC; v5e/v6e: 128 MiB).
    try:
        vmem_cap = int(pltpu.get_tpu_info().vmem_capacity_bytes)
    except Exception:
        vmem_cap = 64 * 1024 * 1024
    budget = (vmem_cap * 3) // 4               # headroom for compiler scratch

    def footprint(tm_, tf_):
        return (2 * tm_ * H * xb               # x tiles (double-buffered)
                + 2 * tm_ * H * xb             # output tiles
                + 2 * 2 * H * tf_ * wb         # w1 + w2 tiles
                + 2 * tf_ * H * wb             # c_proj tiles
                + tm_ * H * 4                  # f32 accumulator scratch
                + tm_ * 3 * tf_ * 4)           # a1 / a2 / gate f32 intermediates

    # Shrink tiles until the double-buffered footprint fits the device budget,
    # preferring to keep the row tile large (arithmetic intensity for prefill).
    while footprint(tm, tf) > budget:
        if tf > 512 and tf % 256 == 0:
            tf //= 2
        elif tm > 256 and tm % 16 == 0:
            tm //= 2
        elif tf > 128 and tf % 256 == 0:
            tf //= 2
        elif tm > 8 and tm % 16 == 0:
            tm //= 2
        else:
            break

    grid_i = pl.cdiv(M, tm)
    nf = pl.cdiv(F, tf)

    est = footprint(tm, tf)
    vmem_limit = int(min(max(est + est // 4, 32 * 1024 * 1024), budget))

    cost = pl.CostEstimate(
        flops=int(6 * M * H * F),
        transcendentals=int(M * F),
        bytes_accessed=int(2 * M * H * xb + grid_i * 3 * H * F * wb),
    )

    out2d = pl.pallas_call(
        functools.partial(qwen_mlp_kernel, F),
        out_shape=jax.ShapeDtypeStruct((M, H), hidden_states.dtype),
        grid_spec=pltpu.PrefetchScalarGridSpec(
            num_scalar_prefetch=0,
            grid=(grid_i, nf),                                 # reduction (f) last
            in_specs=[
                pl.BlockSpec((tm, H), lambda i, f: (i, 0)),    # x row tile
                pl.BlockSpec((H, tf), lambda i, f: (0, f)),    # w1 f-tile
                pl.BlockSpec((H, tf), lambda i, f: (0, f)),    # w2 f-tile
                pl.BlockSpec((tf, H), lambda i, f: (f, 0)),    # c_proj f-tile
            ],
            out_specs=pl.BlockSpec((tm, H), lambda i, f: (i, 0)),
            scratch_shapes=[pltpu.VMEM((tm, H), jnp.float32)],
        ),
        compiler_params=pltpu.CompilerParams(
            dimension_semantics=("parallel", "arbitrary"),
            vmem_limit_bytes=vmem_limit,
        ),
        cost_estimate=cost,
    )(x2d, w1_t, w2_t, cproj_t)

    return out2d.reshape(B, S, H)


def reference_mlp(hidden_states, w1_t, w2_t, cproj_t):
    a1 = hidden_states @ w1_t
    a2 = hidden_states @ w2_t
    return (a1 * (a2 * jax.nn.sigmoid(a2))) @ cproj_t


if __name__ == "__main__":
    key = jax.random.PRNGKey(0)

    def make(k, B, S, H, FF, dtype):
        kx, k1, k2, k3 = jax.random.split(k, 4)
        hs = jax.random.normal(kx, (B, S, H), dtype=jnp.float32)
        # PyTorch nn.Linear weights are (out, in); we pass their transposes (in, out).
        w1_t = (jax.random.normal(k1, (FF, H), dtype=jnp.float32) * 0.05).T
        w2_t = (jax.random.normal(k2, (FF, H), dtype=jnp.float32) * 0.05).T
        cp_t = (jax.random.normal(k3, (H, FF), dtype=jnp.float32) * 0.05).T
        return (hs.astype(dtype), w1_t.astype(dtype),
                w2_t.astype(dtype), cp_t.astype(dtype))

    # ---- Test 1: toy QWen config (hidden_size=32, intermediate_size=128 -> ff=64), f32.
    k, key = jax.random.split(key)
    hs, w1, w2, cp = make(k, 2, 8, 32, 64, jnp.float32)
    out = jax.block_until_ready(qwen_mlp(hs, w1, w2, cp))
    ref = reference_mlp(hs, w1, w2, cp)
    assert out.shape == hs.shape
    assert jnp.allclose(out, ref, atol=1e-4, rtol=1e-4), "f32 mismatch vs reference"

    # ---- Test 2: bf16, ragged M (M=26, tm=16) and ragged F (F=320, tf=128),
    #      exercising the in-kernel masking and the f-axis accumulator.
    k, key = jax.random.split(key)
    hs, w1, w2, cp = make(k, 2, 13, 128, 320, jnp.bfloat16)
    out = jax.block_until_ready(qwen_mlp(hs, w1, w2, cp, tm_max=16, tf_max=128))
    ref = reference_mlp(hs.astype(jnp.float32), w1.astype(jnp.float32),
                        w2.astype(jnp.float32), cp.astype(jnp.float32))
    assert out.shape == hs.shape
    assert jnp.allclose(out.astype(jnp.float32), ref, atol=2e-2, rtol=2e-2), \
        "bf16 ragged mismatch vs reference"

    # ---- Test 3: bf16, evenly tiled M and F (standard multi-tile accumulator path).
    k, key = jax.random.split(key)
    hs, w1, w2, cp = make(k, 2, 64, 128, 256, jnp.bfloat16)
    out = jax.block_until_ready(qwen_mlp(hs, w1, w2, cp, tm_max=64, tf_max=128))
    ref = reference_mlp(hs.astype(jnp.float32), w1.astype(jnp.float32),
                        w2.astype(jnp.float32), cp.astype(jnp.float32))
    assert out.shape == hs.shape
    assert jnp.allclose(out.astype(jnp.float32), ref, atol=2e-2, rtol=2e-2), \
        "bf16 tiled mismatch vs reference"

    print("KERNEL_OK")
</pallas_src>

<mosaic_0001>
module attributes {stable_mosaic.version = 11 : i64} {
  func.func @qwen_mlp_kernel(%arg0: i32, %arg1: i32, %arg2: memref<16x32xf32, #tpu.memory_space<vmem>>, %arg3: memref<32x64xf32, #tpu.memory_space<vmem>>, %arg4: memref<32x64xf32, #tpu.memory_space<vmem>>, %arg5: memref<64x32xf32, #tpu.memory_space<vmem>>, %arg6: memref<16x32xf32, #tpu.memory_space<vmem>>, %arg7: memref<16x32xf32, #tpu.memory_space<vmem>>) attributes {dimension_semantics = [#tpu.dimension_semantics<parallel>, #tpu.dimension_semantics<arbitrary>], iteration_bounds = array<i64: 1, 1>, scalar_prefetch = 0 : i64, scratch_operands = 1 : i64, tpu.core_type = #tpu.core_type<tc>, window_params = [{transform_indices = @transform_0, window_bounds = array<i64: 16, 32>}, {transform_indices = @transform_1, window_bounds = array<i64: 32, 64>}, {transform_indices = @transform_2, window_bounds = array<i64: 32, 64>}, {transform_indices = @transform_3, window_bounds = array<i64: 64, 32>}, {transform_indices = @transform_4, window_bounds = array<i64: 16, 32>}]} {
    %c0_i32 = arith.constant 0 : i32
    %0 = arith.cmpi eq, %arg1, %c0_i32 : i32
    %1 = arith.extui %0 : i1 to i32
    %c0_i32_0 = arith.constant 0 : i32
    %2 = arith.cmpi ne, %1, %c0_i32_0 : i32
    scf.if %2 {
      %cst_19 = arith.constant 0.000000e+00 : f32
      %24 = vector.broadcast %cst_19 : f32 to vector<16x32xf32>
      %c0_20 = arith.constant 0 : index
      %c0_21 = arith.constant 0 : index
      %25 = vector.load %arg7[%c0_20, %c0_21] : memref<16x32xf32, #tpu.memory_space<vmem>>, vector<16x32xf32>
      tpu.vector_store %arg7[%c0_20, %c0_21], %24 {strides = array<i32>} : memref<16x32xf32, #tpu.memory_space<vmem>>, vector<16x32xf32>,
    } else {
    }
    %c0 = arith.constant 0 : index
    %c0_1 = arith.constant 0 : index
    %3 = vector.load %arg2[%c0, %c0_1] : memref<16x32xf32, #tpu.memory_space<vmem>>, vector<16x32xf32>
    %c0_2 = arith.constant 0 : index
    %c0_3 = arith.constant 0 : index
    %4 = vector.load %arg3[%c0_2, %c0_3] : memref<32x64xf32, #tpu.memory_space<vmem>>, vector<32x64xf32>
    %cst = arith.constant dense<0.000000e+00> : vector<16x64xf32>
    %5 = tpu.matmul %3, %4, %cst {dimension_numbers = #tpu.dot_dimension_numbers<[1], [0], [0], [1], [0, 0, 1, 1], [], []>} : vector<16x32xf32>, vector<32x64xf32>, vector<16x64xf32> -> vector<16x64xf32>
    %c0_4 = arith.constant 0 : index
    %c0_5 = arith.constant 0 : index
    %6 = vector.load %arg2[%c0_4, %c0_5] : memref<16x32xf32, #tpu.memory_space<vmem>>, vector<16x32xf32>
    %c0_6 = arith.constant 0 : index
    %c0_7 = arith.constant 0 : index
    %7 = vector.load %arg4[%c0_6, %c0_7] : memref<32x64xf32, #tpu.memory_space<vmem>>, vector<32x64xf32>
    %cst_8 = arith.constant dense<0.000000e+00> : vector<16x64xf32>
    %8 = tpu.matmul %6, %7, %cst_8 {dimension_numbers = #tpu.dot_dimension_numbers<[1], [0], [0], [1], [0, 0, 1, 1], [], []>} : vector<16x32xf32>, vector<32x64xf32>, vector<16x64xf32> -> vector<16x64xf32>
    %9 = arith.negf %8 : vector<16x64xf32>
    %10 = math.exp %9 : vector<16x64xf32>
    %cst_9 = arith.constant 1.000000e+00 : f32
    %11 = vector.broadcast %cst_9 : f32 to vector<16x64xf32>
    %12 = arith.addf %11, %10 : vector<16x64xf32>
    %13 = arith.divf %11, %12 : vector<16x64xf32>
    %14 = arith.mulf %8, %13 : vector<16x64xf32>
    %15 = arith.mulf %5, %14 : vector<16x64xf32>
    %c0_10 = arith.constant 0 : index
    %c0_11 = arith.constant 0 : index
    %16 = vector.load %arg5[%c0_10, %c0_11] : memref<64x32xf32, #tpu.memory_space<vmem>>, vector<64x32xf32>
    %c0_12 = arith.constant 0 : index
    %c0_13 = arith.constant 0 : index
    %17 = vector.load %arg7[%c0_12, %c0_13] : memref<16x32xf32, #tpu.memory_space<vmem>>, vector<16x32xf32>
    %cst_14 = arith.constant dense<0.000000e+00> : vector<16x32xf32>
    %18 = tpu.matmul %15, %16, %cst_14 {dimension_numbers = #tpu.dot_dimension_numbers<[1], [0], [0], [1], [0, 0, 1, 1], [], []>} : vector<16x64xf32>, vector<64x32xf32>, vector<16x32xf32> -> vector<16x32xf32>
    %19 = arith.addf %17, %18 : vector<16x32xf32>
    %c0_15 = arith.constant 0 : index
    %c0_16 = arith.constant 0 : index
    %20 = vector.load %arg7[%c0_15, %c0_16] : memref<16x32xf32, #tpu.memory_space<vmem>>, vector<16x32xf32>
    tpu.vector_store %arg7[%c0_15, %c0_16], %19 {strides = array<i32>} : memref<16x32xf32, #tpu.memory_space<vmem>>, vector<16x32xf32>,
    %c0_i32_17 = arith.constant 0 : i32
    %21 = arith.cmpi eq, %arg1, %c0_i32_17 : i32
    %22 = arith.extui %21 : i1 to i32
    %c0_i32_18 = arith.constant 0 : i32
    %23 = arith.cmpi ne, %22, %c0_i32_18 : i32
    scf.if %23 {
      %c0_19 = arith.constant 0 : index
      %c0_20 = arith.constant 0 : index
      %24 = vector.load %arg7[%c0_19, %c0_20] : memref<16x32xf32, #tpu.memory_space<vmem>>, vector<16x32xf32>
      %c0_21 = arith.constant 0 : index
      %c0_22 = arith.constant 0 : index
      %25 = vector.load %arg6[%c0_21, %c0_22] : memref<16x32xf32, #tpu.memory_space<vmem>>, vector<16x32xf32>
      tpu.vector_store %arg6[%c0_21, %c0_22], %24 {strides = array<i32>} : memref<16x32xf32, #tpu.memory_space<vmem>>, vector<16x32xf32>,
    } else {
    }
    return
  }
  func.func @transform_0(%arg0: i32, %arg1: i32) -> (i32, i32) {
    %c0_i32 = arith.constant 0 : i32
    %c0_i32_0 = arith.constant 0 : i32
    return %arg0, %c0_i32 : i32, i32
  }
  func.func @transform_1(%arg0: i32, %arg1: i32) -> (i32, i32) {
    %c0_i32 = arith.constant 0 : i32
    %c0_i32_0 = arith.constant 0 : i32
    return %c0_i32, %arg1 : i32, i32
  }
  func.func @transform_2(%arg0: i32, %arg1: i32) -> (i32, i32) {
    %c0_i32 = arith.constant 0 : i32
    %c0_i32_0 = arith.constant 0 : i32
    return %c0_i32, %arg1 : i32, i32
  }
  func.func @transform_3(%arg0: i32, %arg1: i32) -> (i32, i32) {
    %c0_i32 = arith.constant 0 : i32
    %c0_i32_0 = arith.constant 0 : i32
    return %arg1, %c0_i32 : i32, i32
  }
  func.func @transform_4(%arg0: i32, %arg1: i32) -> (i32, i32) {
    %c0_i32 = arith.constant 0 : i32
    %c0_i32_0 = arith.constant 0 : i32
    return %arg0, %c0_i32 : i32, i32
  }
}

</mosaic_0001>

<llo_original>
// kernel: qwen_mlp.1
$region0: #{qwen_mlp.1}
  #allocation0 [shape = 'u32[]', space=smem, size = 0x4, offset = 0x4, fixed_abs, tag = 'smem constant byte address 0x4 - core index']
  #allocation1 [shape = 'u32[72,128]{1,0:T(1,128)}', space=vmem, size = 0x9000, scoped, tag = 'internal scratch']
  #allocation2 [shape = 'f32[16,32]{1,0:T(8,128)}', space=vmem, size = 0x2000, scoped, tag = 'scratch operand']
  %s0 = inlined_call_operand.vmem [shape: f32[16,32], index: 0, kind: input, shape index: {}]
  %s1 = inlined_call_operand.vmem [shape: f32[32,64], index: 1, kind: input, shape index: {}]
  %s2 = inlined_call_operand.vmem [shape: f32[32,64], index: 2, kind: input, shape index: {}]
  %s3 = inlined_call_operand.vmem [shape: f32[64,32], index: 3, kind: input, shape index: {}]
  %s4 = inlined_call_operand.hbm [shape: f32[16,32], index: 4, kind: output, shape index: {}]
  %s5 = sld [smem:[#allocation0]]
  $region34: #{qwen_mlp.1} parent=0
    _
  %s7 = ssub.s32 1, %s5
  %s8 = scalar_select 0, %s7, %s5
  $region1: #{qwen_mlp.1} parent=0
    #allocation3 [shape = 'u8[8192]{0}', space=vmem, size = 0x2000, scoped, tag = 'output window, operand 0, single buffered']
    #allocation4 [shape = 's32[1]{0}', space=sflag, size = 0x4, scoped, tag = 'scoped memory for qwen_mlp.1']
    %9 = vsyncpa [#allocation4], 0
    // Predicated region
    $region2: #{qwen_mlp.1} parent=1 // pred_check
      _
    $region3: #{qwen_mlp.1} parent=1 // pred_check_branch
      %11 = sbr.rel (0) target = $region5
    $region4: #{qwen_mlp.1} parent=1 // pred_region
      _
    $region5: #{qwen_mlp.1} parent=1 // pred_fallthru
      _
    // Predicated region
    $region6: #{qwen_mlp.1} parent=1 // pred_check
      _
    $region7: #{qwen_mlp.1} parent=1 // pred_check_branch
      %13 = sbr.rel (0) target = $region9
    $region8: #{qwen_mlp.1} parent=1 // pred_region
      _
    $region9: #{qwen_mlp.1} parent=1 // pred_fallthru
      _
    // Predicated region
    $region10: #{qwen_mlp.1} parent=1 // pred_check
      _
    $region11: #{qwen_mlp.1} parent=1 // pred_check_branch
      %15 = sbr.rel (0) target = $region13
    $region12: #{qwen_mlp.1} parent=1 // pred_region
      _
    $region13: #{qwen_mlp.1} parent=1 // pred_fallthru
      _
    // Predicated region
    $region14: #{qwen_mlp.1} parent=1 // pred_check
      _
    $region15: #{qwen_mlp.1} parent=1 // pred_check_branch
      %17 = sbr.rel (0) target = $region17
    $region16: #{qwen_mlp.1} parent=1 // pred_region
      _
    $region17: #{qwen_mlp.1} parent=1 // pred_fallthru
      _
    %p18 = scmp.eq.s32.totalorder 0, 0
    // Predicated region
    $region18: #{qwen_mlp.1} parent=1 // pred_check
      %p19 = pneg %p18
    $region19: #{qwen_mlp.1} parent=1 // pred_check_branch
      %21 = sbr.rel (%p19) target = $region21
    $region20: #{qwen_mlp.1} parent=1 // pred_region
      %vm22 = vcmask 261120
      %23 = vst.msk [vmem:[#allocation2] sm:$0xff] %vm22, 0.0
      %24 = vst.msk [vmem:[#allocation2 + $0x8] sm:$0xff] %vm22, 0.0
    $region21: #{qwen_mlp.1} parent=1 // pred_fallthru
      _
    %v25 = vld [vmem:[%s0] sm:$0xff]
    %v26 = vld [vmem:[%s0 + $0x8] sm:$0xff]
    %v27 = vld [vmem:[%s1] sm:$0xff]
    %v28 = vld [vmem:[%s1 + $0x8] sm:$0xff]
    %v29 = vld [vmem:[%s1 + $0x10] sm:$0xff]
    %v30 = vld [vmem:[%s1 + $0x18] sm:$0xff]
    %vm31 = vcmask 261120
    %v33 = vsel %vm31, %v25, 0
    %v36 = vsel %vm31, %v26, 0
    %38 = vmatpush.msra.mxu0 0.0
    %39 = vmatpush.msra.mxu0 0.0
    %40 = vmatpush.msra.mxu0 0.0
    %41 = vmatpush.msra.mxu0 0.0
    %42 = vmatpush.msra.mxu0 0.0
    %43 = vmatpush.msra.mxu0 0.0
    %44 = vmatpush.msra.mxu0 0.0
    %45 = vmatpush.msra.mxu0 0.0
    %46 = vmatpush.msra.mxu0 0.0
    %47 = vmatpush.msra.mxu0 0.0
    %48 = vmatpush.msra.mxu0 0.0
    %49 = vmatpush.msra.mxu0 0.0
    %50 = vmatpush.msra.mxu0 %v30
    %51 = vmatpush.msra.mxu0 %v29
    %52 = vmatpush.msra.mxu0 %v28
    %53 = vmatpush.msra.mxu0 %v27
    %54 = vmatmul.f32.gmra.mxu0 %v33
    %v55 = vpop.f32.mrf.mxu0
    %v56 = vadd.f32 0.0, %v55
    %57 = vmatmul.f32.gmra.mxu0 %v36
    %v58 = vpop.f32.mrf.mxu0
    %v59 = vadd.f32 0.0, %v58
    %60 = vdwg.mxu0
    %v61 = vld [vmem:[%s2] sm:$0xff]
    %v62 = vld [vmem:[%s2 + $0x8] sm:$0xff]
    %v63 = vld [vmem:[%s2 + $0x10] sm:$0xff]
    %v64 = vld [vmem:[%s2 + $0x18] sm:$0xff]
    %65 = vmatpush.msra.mxu0 0.0
    %66 = vmatpush.msra.mxu0 0.0
    %67 = vmatpush.msra.mxu0 0.0
    %68 = vmatpush.msra.mxu0 0.0
    %69 = vmatpush.msra.mxu0 0.0
    %70 = vmatpush.msra.mxu0 0.0
    %71 = vmatpush.msra.mxu0 0.0
    %72 = vmatpush.msra.mxu0 0.0
    %73 = vmatpush.msra.mxu0 0.0
    %74 = vmatpush.msra.mxu0 0.0
    %75 = vmatpush.msra.mxu0 0.0
    %76 = vmatpush.msra.mxu0 0.0
    %77 = vmatpush.msra.mxu0 %v64
    %78 = vmatpush.msra.mxu0 %v63
    %79 = vmatpush.msra.mxu0 %v62
    %80 = vmatpush.msra.mxu0 %v61
    %81 = vmatmul.f32.gmra.mxu0 %v33
    %v82 = vpop.f32.mrf.mxu0
    %v83 = vadd.f32 0.0, %v82
    %84 = vmatmul.f32.gmra.mxu0 %v36
    %v85 = vpop.f32.mrf.mxu0
    %v86 = vadd.f32 0.0, %v85
    %87 = vdwg.mxu0
    %v88 = vxor.u32 %v83, 2147483648
    %v89 = vxor.u32 %v86, 2147483648
    %v90 = vmul.f32 %v88, 1.442695
    %v91 = vpow.pop %v90
    %v92 = vmul.f32 %v89, 1.442695
    %v93 = vpow.pop %v92
    %v94 = vadd.f32 %v91, 1.0
    %v95 = vadd.f32 %v93, 1.0
    %v96 = vrcp.pop %v94
    %v97 = vmul.f32 %v94, %v96
    %v98 = vsub.f32 1.0, %v97
    %v99 = vmul.f32 %v96, %v98
    %v100 = vadd.f32 %v96, %v99
    %vm101 = vweird.f32 %v94
    %vm102 = vweird.f32 %v96
    %vm103 = vmor %vm101, %vm102
    %v104 = vsel %vm103, %v96, %v100
    %v105 = vand.u32 2147483647, %v94
    %vm106 = vcmp.eq.f32.partialorder %v105, 8.507059e+37
    %v107 = vand.u32 %v94, 2147483648
    %v108 = vor.u32 1.1754944e-38, %v107
    %v109 = vsel %vm106, %v108, %v104
    %v110 = vmul.f32 1.0, %v109
    %v111 = vrcp.pop %v95
    %v112 = vmul.f32 %v95, %v111
    %v113 = vsub.f32 1.0, %v112
    %v114 = vmul.f32 %v111, %v113
    %v115 = vadd.f32 %v111, %v114
    %vm116 = vweird.f32 %v95
    %vm117 = vweird.f32 %v111
    %vm118 = vmor %vm116, %vm117
    %v119 = vsel %vm118, %v111, %v115
    %v120 = vand.u32 2147483647, %v95
    %vm121 = vcmp.eq.f32.partialorder %v120, 8.507059e+37
    %v122 = vand.u32 %v95, 2147483648
    %v123 = vor.u32 1.1754944e-38, %v122
    %v124 = vsel %vm121, %v123, %v119
    %v125 = vmul.f32 1.0, %v124
    %v126 = vmul.f32 %v83, %v110
    %v127 = vmul.f32 %v86, %v125
    %v128 = vmul.f32 %v56, %v126
    %v129 = vmul.f32 %v59, %v127
    %v130 = vld [vmem:[%s3] sm:$0xff]
    %v131 = vld [vmem:[%s3 + $0x8] sm:$0xff]
    %v132 = vld [vmem:[%s3 + $0x10] sm:$0xff]
    %v133 = vld [vmem:[%s3 + $0x18] sm:$0xff]
    %v134 = vld [vmem:[%s3 + $0x20] sm:$0xff]
    %v135 = vld [vmem:[%s3 + $0x28] sm:$0xff]
    %v136 = vld [vmem:[%s3 + $0x30] sm:$0xff]
    %v137 = vld [vmem:[%s3 + $0x38] sm:$0xff]
    %v138 = vld [vmem:[#allocation2] sm:$0xff]
    %v139 = vld [vmem:[#allocation2 + $0x8] sm:$0xff]
    %vm140 = vcmask 523264
    %v142 = vsel %vm140, %v128, 0
    %v145 = vsel %vm140, %v129, 0
    %147 = vmatpush.msra.mxu0 0.0
    %148 = vmatpush.msra.mxu0 0.0
    %149 = vmatpush.msra.mxu0 0.0
    %150 = vmatpush.msra.mxu0 0.0
    %151 = vmatpush.msra.mxu0 0.0
    %152 = vmatpush.msra.mxu0 0.0
    %153 = vmatpush.msra.mxu0 0.0
    %154 = vmatpush.msra.mxu0 0.0
    %155 = vmatpush.msra.mxu0 %v137
    %156 = vmatpush.msra.mxu0 %v136
    %157 = vmatpush.msra.mxu0 %v135
    %158 = vmatpush.msra.mxu0 %v134
    %159 = vmatpush.msra.mxu0 %v133
    %160 = vmatpush.msra.mxu0 %v132
    %161 = vmatpush.msra.mxu0 %v131
    %162 = vmatpush.msra.mxu0 %v130
    %163 = vmatmul.f32.gmra.mxu0 %v142
    %v164 = vpop.f32.mrf.mxu0
    %v165 = vadd.f32 0.0, %v164
    %166 = vmatmul.f32.gmra.mxu0 %v145
    %v167 = vpop.f32.mrf.mxu0
    %v168 = vadd.f32 0.0, %v167
    %169 = vdwg.mxu0
    %v170 = vadd.f32 %v138, %v165
    %v171 = vadd.f32 %v139, %v168
    %172 = vst.msk [vmem:[#allocation2] sm:$0xff] %vm31, %v170
    %173 = vst.msk [vmem:[#allocation2 + $0x8] sm:$0xff] %vm31, %v171
    // Predicated region
    $region22: #{qwen_mlp.1} parent=1 // pred_check
      %p174 = pneg %p18
    $region23: #{qwen_mlp.1} parent=1 // pred_check_branch
      %176 = sbr.rel (%p174) target = $region25
    $region24: #{qwen_mlp.1} parent=1 // pred_region
      %v177 = vld [vmem:[#allocation2] sm:$0xff]
      %v178 = vld [vmem:[#allocation2 + $0x8] sm:$0xff]
      %179 = vst.msk [vmem:[#allocation3] sm:$0xff] %vm31, %v177
      %180 = vst.msk [vmem:[#allocation3 + $0x8] sm:$0xff] %vm31, %v178
    $region25: #{qwen_mlp.1} parent=1 // pred_fallthru
      _
    // Predicated region
    $region26: #{qwen_mlp.1} parent=1 // pred_check
      _
    $region27: #{qwen_mlp.1} parent=1 // pred_check_branch
      %182 = sbr.rel (0) target = $region29
    $region28: #{qwen_mlp.1} parent=1 // pred_region
      %184 = vsyncadd [#allocation4], 0
      %s185 = sshll.u32 [#allocation3], 4
      %s186 = int_to_ptr.vmem [resolvable:$true] %s185
      %s187 = sshll.u32 %s4, 4
      %s188 = int_to_ptr.hbm [resolvable:$true] %s187
      %193 = dma.vmem_to_hbm [thread:$0]  %s186, 256, %s188, [#allocation4], 128, 128, 8
    $region29: #{qwen_mlp.1} parent=1 // pred_fallthru
      _
    // Predicated region
    $region30: #{qwen_mlp.1} parent=1 // pred_check
      _
    $region31: #{qwen_mlp.1} parent=1 // pred_check_branch
      %195 = sbr.rel (0) target = $region33
    $region32: #{qwen_mlp.1} parent=1 // pred_region
      %197 = dma.done [#allocation4], 256
    $region33: #{qwen_mlp.1} parent=1 // pred_fallthru
      _
    %198 = vsyncpa [#allocation4], 1

</llo_original>
